<compile_context>
chip_gen: v7x
topology: tpu7x:2x2x1
jax: 0.10.0
libtpu: 0.0.40
codegen_flags: <defaults>
</compile_context>

<pallas_src>
import functools

import jax
import jax.numpy as jnp
from jax.experimental import pallas as pl
from jax.experimental.pallas import tpu as pltpu


def _round_up(n, m):
    return ((n + m - 1) // m) * m


def stability_net_kernel(x_ref, w1_ref, b1_ref, w2_ref, b2_ref, w3_ref, b3_ref, o_ref):
    # x_ref: (3, TB) batch tile (pipelined); weights/biases resident; o_ref: (1, TB).
    x = x_ref[...]
    # fc1 + relu: (16, 3) @ (3, TB) + (16, 1)
    h1 = jnp.dot(w1_ref[...], x, preferred_element_type=jnp.float32) + b1_ref[...]
    h1 = jnp.maximum(h1, 0.0)
    # fc2 + relu: (8, 16) @ (16, TB) + (8, 1)
    h2 = jnp.dot(w2_ref[...], h1, preferred_element_type=jnp.float32) + b2_ref[...]
    h2 = jnp.maximum(h2, 0.0)
    # fc3 + sigmoid: (1, 8) @ (8, TB) + (1, 1)
    z = jnp.dot(w3_ref[...], h2, preferred_element_type=jnp.float32) + b3_ref[...]
    o_ref[...] = jax.nn.sigmoid(z)


def _choose_tb(batch, tb):
    """Pick a lane-tile width: >=2 balanced grid steps (v7x megacore), 128-aligned,
    large enough to amortize per-step overhead, capped for v5e's 16 MiB scoped VMEM."""
    if tb is None:
        tb = min(32768, _round_up(max(1, pl.cdiv(batch, 2)), 128))
    tb = _round_up(max(int(tb), 128), 128)
    return min(tb, 65536)


@functools.partial(jax.jit, static_argnames=("tb",))
def stability_net_batch_last(xt, params, *, tb=None):
    """Preferred path. xt: (3, B) f32 (batch-last) -> (1, B) f32.

    Avoids the wrapper-side transpose entirely; pads/slices only if B % tb != 0.
    """
    w1, b1, w2, b2, w3, b3 = params
    B = xt.shape[1]
    tb = _choose_tb(B, tb)
    n_tiles = pl.cdiv(B, tb)
    bp = n_tiles * tb

    if bp != B:
        xt = jnp.pad(xt, ((0, 0), (0, bp - B)))

    # ~368 MACs*2 + activations per batch column; 16 B/column of HBM traffic.
    flops_per_col = 2 * (16 * 3 + 8 * 16 + 1 * 8) + 16 + 8 + 1
    cost = pl.CostEstimate(
        flops=flops_per_col * bp,
        transcendentals=bp,                 # one sigmoid per column
        bytes_accessed=(3 + 1) * 4 * bp,    # read (3,B) f32, write (1,B) f32
    )

    out = pl.pallas_call(
        stability_net_kernel,
        out_shape=jax.ShapeDtypeStruct((1, bp), jnp.float32),
        grid=(n_tiles,),
        in_specs=[
            pl.BlockSpec((3, tb), lambda i: (0, i)),    # batch tile of x (pipelined)
            pl.BlockSpec((16, 3), lambda i: (0, 0)),    # fc1 weight (VMEM-resident)
            pl.BlockSpec((16, 1), lambda i: (0, 0)),    # fc1 bias
            pl.BlockSpec((8, 16), lambda i: (0, 0)),    # fc2 weight
            pl.BlockSpec((8, 1), lambda i: (0, 0)),     # fc2 bias
            pl.BlockSpec((1, 8), lambda i: (0, 0)),     # fc3 weight
            pl.BlockSpec((1, 1), lambda i: (0, 0)),     # fc3 bias
        ],
        out_specs=pl.BlockSpec((1, tb), lambda i: (0, i)),
        compiler_params=pltpu.CompilerParams(
            dimension_semantics=("parallel",),          # split batch tiles across v7x TCs
        ),
        cost_estimate=cost,
    )(xt, w1, b1, w2, b2, w3, b3)

    if bp != B:
        out = out[:, :B]
    return out


@functools.partial(jax.jit, static_argnames=("tb",))
def stability_net(x, params, *, tb=None):
    """Compatibility path matching the PyTorch module: x (B, 3) -> (B, 1).

    NOTE: this does one extra HBM pass to put the batch on the lane axis; producers
    that can supply x batch-last should call `stability_net_batch_last` directly.
    """
    out = stability_net_batch_last(x.T, params, tb=tb)
    return out.reshape(x.shape[0], 1)


def stability_net_ref(x, params):
    """Pure-JAX reference (also the sensible dispatch for genuinely tiny batches)."""
    w1, b1, w2, b2, w3, b3 = params
    h1 = jnp.maximum(x @ w1.T + b1.T, 0.0)
    h2 = jnp.maximum(h1 @ w2.T + b2.T, 0.0)
    return jax.nn.sigmoid(h2 @ w3.T + b3.T)


def init_params(key):
    """Deterministic init mirroring nn.Linear: weights (out, in), biases (out, 1)."""
    ks = jax.random.split(key, 6)

    def linear(kw, kb, fan_in, fan_out):
        bound = 1.0 / jnp.sqrt(fan_in)
        w = jax.random.uniform(kw, (fan_out, fan_in), jnp.float32, -bound, bound)
        b = jax.random.uniform(kb, (fan_out, 1), jnp.float32, -bound, bound)
        return w, b

    w1, b1 = linear(ks[0], ks[1], 3, 16)
    w2, b2 = linear(ks[2], ks[3], 16, 8)
    w3, b3 = linear(ks[4], ks[5], 8, 1)
    return (w1, b1, w2, b2, w3, b3)


if __name__ == "__main__":
    key = jax.random.PRNGKey(0)
    k_in, k_param = jax.random.split(key)
    params = init_params(k_param)

    # 1) PyTorch-layout path: B not a tile multiple -> exercises pad + 2 balanced tiles
    #    (adaptive tb picks 512 here so both grid steps carry equal work).
    B = 1000
    x = jax.random.normal(k_in, (B, 3), jnp.float32)
    out = jax.block_until_ready(stability_net(x, params))
    ref = stability_net_ref(x, params)
    assert out.shape == (B, 1)
    assert jnp.allclose(out, ref, atol=1e-5, rtol=1e-5), float(jnp.max(jnp.abs(out - ref)))

    # 2) Preferred batch-last path: (3, B) input, tile-multiple B -> no transpose,
    #    no pad, no post-kernel slice.
    B2 = 1024
    xt = jax.random.normal(jax.random.PRNGKey(1), (3, B2), jnp.float32)
    out2 = jax.block_until_ready(stability_net_batch_last(xt, params, tb=512))
    ref2 = stability_net_ref(xt.T, params)
    assert out2.shape == (1, B2)
    assert jnp.allclose(out2.reshape(B2, 1), ref2, atol=1e-5, rtol=1e-5), float(
        jnp.max(jnp.abs(out2.reshape(B2, 1) - ref2))
    )

    print("KERNEL_OK")
</pallas_src>

<mosaic_0001>
module attributes {stable_mosaic.version = 11 : i64} {
  func.func @stability_net_kernel(%arg0: i32, %arg1: memref<3x512xf32, #tpu.memory_space<vmem>>, %arg2: memref<16x3xf32, #tpu.memory_space<vmem>>, %arg3: memref<16x1xf32, #tpu.memory_space<vmem>>, %arg4: memref<8x16xf32, #tpu.memory_space<vmem>>, %arg5: memref<8x1xf32, #tpu.memory_space<vmem>>, %arg6: memref<1x8xf32, #tpu.memory_space<vmem>>, %arg7: memref<1x1xf32, #tpu.memory_space<vmem>>, %arg8: memref<1x512xf32, #tpu.memory_space<vmem>>) attributes {dimension_semantics = [#tpu.dimension_semantics<parallel>], iteration_bounds = array<i64: 2>, scalar_prefetch = 0 : i64, scratch_operands = 0 : i64, tpu.core_type = #tpu.core_type<tc>, window_params = [{transform_indices = @transform_0, window_bounds = array<i64: 3, 512>}, {pipeline_mode = #tpu.pipeline_mode<synchronous>, transform_indices = @transform_1, window_bounds = array<i64: 16, 3>}, {pipeline_mode = #tpu.pipeline_mode<synchronous>, transform_indices = @transform_2, window_bounds = array<i64: 16, 1>}, {pipeline_mode = #tpu.pipeline_mode<synchronous>, transform_indices = @transform_3, window_bounds = array<i64: 8, 16>}, {pipeline_mode = #tpu.pipeline_mode<synchronous>, transform_indices = @transform_4, window_bounds = array<i64: 8, 1>}, {pipeline_mode = #tpu.pipeline_mode<synchronous>, transform_indices = @transform_5, window_bounds = array<i64: 1, 8>}, {pipeline_mode = #tpu.pipeline_mode<synchronous>, transform_indices = @transform_6, window_bounds = array<i64: 1, 1>}, {transform_indices = @transform_7, window_bounds = array<i64: 1, 512>}]} {
    %c0 = arith.constant 0 : index
    %c0_0 = arith.constant 0 : index
    %0 = vector.load %arg1[%c0, %c0_0] : memref<3x512xf32, #tpu.memory_space<vmem>>, vector<3x512xf32>
    %c0_1 = arith.constant 0 : index
    %c0_2 = arith.constant 0 : index
    %1 = vector.load %arg2[%c0_1, %c0_2] : memref<16x3xf32, #tpu.memory_space<vmem>>, vector<16x3xf32>
    %cst = arith.constant dense<0.000000e+00> : vector<16x512xf32>
    %2 = tpu.matmul %1, %0, %cst {dimension_numbers = #tpu.dot_dimension_numbers<[1], [0], [0], [1], [0, 0, 1, 1], [], []>} : vector<16x3xf32>, vector<3x512xf32>, vector<16x512xf32> -> vector<16x512xf32>
    %c0_3 = arith.constant 0 : index
    %c0_4 = arith.constant 0 : index
    %3 = vector.load %arg3[%c0_3, %c0_4] : memref<16x1xf32, #tpu.memory_space<vmem>>, vector<16x1xf32>
    %4 = vector.broadcast %3 : vector<16x1xf32> to vector<16x512xf32>
    %5 = arith.addf %2, %4 : vector<16x512xf32>
    %cst_5 = arith.constant 0.000000e+00 : f32
    %6 = vector.broadcast %cst_5 : f32 to vector<16x512xf32>
    %7 = arith.maximumf %5, %6 : vector<16x512xf32>
    %c0_6 = arith.constant 0 : index
    %c0_7 = arith.constant 0 : index
    %8 = vector.load %arg4[%c0_6, %c0_7] : memref<8x16xf32, #tpu.memory_space<vmem>>, vector<8x16xf32>
    %cst_8 = arith.constant dense<0.000000e+00> : vector<8x512xf32>
    %9 = tpu.matmul %8, %7, %cst_8 {dimension_numbers = #tpu.dot_dimension_numbers<[1], [0], [0], [1], [0, 0, 1, 1], [], []>} : vector<8x16xf32>, vector<16x512xf32>, vector<8x512xf32> -> vector<8x512xf32>
    %c0_9 = arith.constant 0 : index
    %c0_10 = arith.constant 0 : index
    %10 = vector.load %arg5[%c0_9, %c0_10] : memref<8x1xf32, #tpu.memory_space<vmem>>, vector<8x1xf32>
    %11 = vector.broadcast %10 : vector<8x1xf32> to vector<8x512xf32>
    %12 = arith.addf %9, %11 : vector<8x512xf32>
    %cst_11 = arith.constant 0.000000e+00 : f32
    %13 = vector.broadcast %cst_11 : f32 to vector<8x512xf32>
    %14 = arith.maximumf %12, %13 : vector<8x512xf32>
    %c0_12 = arith.constant 0 : index
    %c0_13 = arith.constant 0 : index
    %15 = vector.load %arg6[%c0_12, %c0_13] : memref<1x8xf32, #tpu.memory_space<vmem>>, vector<1x8xf32>
    %cst_14 = arith.constant dense<0.000000e+00> : vector<1x512xf32>
    %16 = tpu.matmul %15, %14, %cst_14 {dimension_numbers = #tpu.dot_dimension_numbers<[1], [0], [0], [1], [0, 0, 1, 1], [], []>} : vector<1x8xf32>, vector<8x512xf32>, vector<1x512xf32> -> vector<1x512xf32>
    %c0_15 = arith.constant 0 : index
    %c0_16 = arith.constant 0 : index
    %17 = vector.load %arg7[%c0_15, %c0_16] : memref<1x1xf32, #tpu.memory_space<vmem>>, vector<1x1xf32>
    %18 = vector.broadcast %17 : vector<1x1xf32> to vector<1x512xf32>
    %19 = arith.addf %16, %18 : vector<1x512xf32>
    %20 = arith.negf %19 : vector<1x512xf32>
    %21 = math.exp %20 : vector<1x512xf32>
    %cst_17 = arith.constant 1.000000e+00 : f32
    %22 = vector.broadcast %cst_17 : f32 to vector<1x512xf32>
    %23 = arith.addf %22, %21 : vector<1x512xf32>
    %24 = arith.divf %22, %23 : vector<1x512xf32>
    %c0_18 = arith.constant 0 : index
    %c0_19 = arith.constant 0 : index
    %25 = vector.load %arg8[%c0_18, %c0_19] : memref<1x512xf32, #tpu.memory_space<vmem>>, vector<1x512xf32>
    tpu.vector_store %arg8[%c0_18, %c0_19], %24 {strides = array<i32>} : memref<1x512xf32, #tpu.memory_space<vmem>>, vector<1x512xf32>,
    return
  }
  func.func @transform_0(%arg0: i32) -> (i32, i32) {
    %c0_i32 = arith.constant 0 : i32
    %c0_i32_0 = arith.constant 0 : i32
    return %c0_i32, %arg0 : i32, i32
  }
  func.func @transform_1(%arg0: i32) -> (i32, i32) {
    %c0_i32 = arith.constant 0 : i32
    %c0_i32_0 = arith.constant 0 : i32
    %c0_i32_1 = arith.constant 0 : i32
    return %c0_i32, %c0_i32_0 : i32, i32
  }
  func.func @transform_2(%arg0: i32) -> (i32, i32) {
    %c0_i32 = arith.constant 0 : i32
    %c0_i32_0 = arith.constant 0 : i32
    %c0_i32_1 = arith.constant 0 : i32
    return %c0_i32, %c0_i32_0 : i32, i32
  }
  func.func @transform_3(%arg0: i32) -> (i32, i32) {
    %c0_i32 = arith.constant 0 : i32
    %c0_i32_0 = arith.constant 0 : i32
    %c0_i32_1 = arith.constant 0 : i32
    return %c0_i32, %c0_i32_0 : i32, i32
  }
  func.func @transform_4(%arg0: i32) -> (i32, i32) {
    %c0_i32 = arith.constant 0 : i32
    %c0_i32_0 = arith.constant 0 : i32
    %c0_i32_1 = arith.constant 0 : i32
    return %c0_i32, %c0_i32_0 : i32, i32
  }
  func.func @transform_5(%arg0: i32) -> (i32, i32) {
    %c0_i32 = arith.constant 0 : i32
    %c0_i32_0 = arith.constant 0 : i32
    %c0_i32_1 = arith.constant 0 : i32
    return %c0_i32, %c0_i32_0 : i32, i32
  }
  func.func @transform_6(%arg0: i32) -> (i32, i32) {
    %c0_i32 = arith.constant 0 : i32
    %c0_i32_0 = arith.constant 0 : i32
    %c0_i32_1 = arith.constant 0 : i32
    return %c0_i32, %c0_i32_0 : i32, i32
  }
  func.func @transform_7(%arg0: i32) -> (i32, i32) {
    %c0_i32 = arith.constant 0 : i32
    %c0_i32_0 = arith.constant 0 : i32
    return %c0_i32, %arg0 : i32, i32
  }
}

</mosaic_0001>

<llo_original>
// kernel: stability_net_batch_last.1
$region0: #{stability_net_batch_last.1}
  #allocation0 [shape = 'u32[]', space=smem, size = 0x4, offset = 0x4, fixed_abs, tag = 'smem constant byte address 0x4 - core index']
  #allocation1 [shape = 'u32[144,128]{1,0:T(1,128)}', space=vmem, size = 0x12000, scoped, tag = 'internal scratch']
  #allocation2 [shape = 'f32[1,1]{1,0:T(1,128)S(1)}', space=vmem, size = 0x200, scoped, tag = 'scoped memory for stability_net_batch_last.1']
  %s0 = inlined_call_operand.vmem [shape: f32[3,1024], index: 0, kind: input, shape index: {}]
  %s1 = inlined_call_operand.vmem [shape: f32[16,3], index: 1, kind: input, shape index: {}]
  %s2 = inlined_call_operand.vmem [shape: f32[16,1], index: 2, kind: input, shape index: {}]
  %s3 = inlined_call_operand.vmem [shape: f32[8,16], index: 3, kind: input, shape index: {}]
  %s4 = inlined_call_operand.vmem [shape: f32[8,1], index: 4, kind: input, shape index: {}]
  %s5 = inlined_call_operand.vmem [shape: f32[1,8], index: 5, kind: input, shape index: {}]
  %s6 = inlined_call_operand.<no memory space> [shape: f32[1,1], index: 6, kind: input, shape index: {}]
  %s7 = inlined_call_operand.hbm [shape: f32[1,1024], index: 7, kind: output, shape index: {}]
  %s8 = sld [smem:[#allocation0]]
  $region61: #{stability_net_batch_last.1} parent=0
    _
  %s10 = ssub.s32 1, %s8
  %s11 = scalar_select 0, %s10, %s8
  %v12 = vstv %s6
  %13 = vst [vmem:[#allocation2] sm:$0x1] %v12
  $region1: #{stability_net_batch_last.1} parent=0
    #allocation3 [shape = 'u8[4096]{0}', space=vmem, size = 0x1000, scoped, tag = 'output window, operand 0']
    #allocation4 [shape = 's32[2]{0}', space=sflag, size = 0x8, scoped, tag = 'scoped memory for stability_net_batch_last.1']
    %14 = vsyncpa [#allocation4], 0
    %s15 = scalar_lea.sflag [#allocation4], 1
    %16 = vsyncpa %s15, 0
    loop: start=0, step=1, limit=4
    $region2: #{stability_net_batch_last.1} parent=1 // loop_pre_header
      _
    $region3: #{stability_net_batch_last.1} parent=1 // loop_header
      %s18 = sphi 0, %s22
      %p19 = scmp.ge.s32.totalorder %s18, 4
      %s28 = sphi 0, %s30
      %s31 = sphi 0, %s28
      %s32 = sphi 0, %s31
      %s48 = sphi 0, %s32
      %s52 = sphi 0, %s52
      %s54 = sphi 0, %s52
      %s55 = sphi 0, %s54
      %s69 = sphi 0, %s55
      %s73 = sphi 0, %s73
      %s75 = sphi 0, %s73
      %s76 = sphi 0, %s75
      %s90 = sphi 0, %s76
      %s94 = sphi 0, %s94
      %s96 = sphi 0, %s94
      %s97 = sphi 0, %s96
      %s111 = sphi 0, %s97
      %s115 = sphi 0, %s115
      %s117 = sphi 0, %s115
      %s118 = sphi 0, %s117
      %s132 = sphi 0, %s118
      %s136 = sphi 0, %s136
      %s138 = sphi 0, %s136
      %s139 = sphi 0, %s138
      %s153 = sphi 0, %s139
      %s157 = sphi 0, %s157
      %s159 = sphi 0, %s157
      %s160 = sphi 0, %s159
      %s174 = sphi 0, %s160
      %s180 = sphi 0, %s182
      %s183 = sphi 0, %s180
      %s184 = sphi 0, %s183
      %s200 = sphi 0, %s184
    $region4: #{stability_net_batch_last.1} parent=1 // loop_header_branch
      %21 = sbr.rel (%p19) target = $region8
    $region5: #{stability_net_batch_last.1} parent=1 // loop_body
      %s23 = ssub.s32 %s18, 1
      %s24 = ssub.s32 %s18, 2
      %s25 = sadd.s32 %s18, 1
      %s26 = ssub.s32 %s18, %s25
      %p27 = scmp.eq.s32.totalorder %s26, 0
      %s29 = sadd.s32 %s28, 1
      %s30 = scalar_select %p27, %s28, %s29
      %p33 = pneg %p27
      %p34 = scmp.eq.s32.totalorder %s18, 1
      %p35 = por %p33, %p34
      %p36 = scmp.ne.s32.totalorder %s28, %s31
      %p37 = scmp.eq.s32.totalorder %s18, 0
      %p38 = por %p36, %p37
      %p39 = scmp.ne.s32.totalorder %s28, %s31
      %p40 = scmp.eq.s32.totalorder %s23, 1
      %p41 = por %p39, %p40
      %p42 = scmp.ne.s32.totalorder %s31, %s32
      %p43 = scmp.eq.s32.totalorder %s23, 0
      %p44 = por %p42, %p43
      %p45 = scmp.ne.s32.totalorder %s31, %s32
      %p46 = scmp.eq.s32.totalorder %s24, 1
      %p47 = por %p45, %p46
      %p49 = scmp.ne.s32.totalorder %s32, %s48
      %p50 = scmp.eq.s32.totalorder %s24, 0
      %p51 = por %p49, %p50
      %s53 = sadd.s32 %s52, 1
      %p56 = scmp.eq.s32.totalorder %s18, 1
      %p57 = scmp.ne.s32.totalorder %s52, %s54
      %p58 = scmp.eq.s32.totalorder %s18, 0
      %p59 = por %p57, %p58
      %p60 = scmp.ne.s32.totalorder %s52, %s54
      %p61 = scmp.eq.s32.totalorder %s23, 1
      %p62 = por %p60, %p61
      %p63 = scmp.ne.s32.totalorder %s54, %s55
      %p64 = scmp.eq.s32.totalorder %s23, 0
      %p65 = por %p63, %p64
      %p66 = scmp.ne.s32.totalorder %s54, %s55
      %p67 = scmp.eq.s32.totalorder %s24, 1
      %p68 = por %p66, %p67
      %p70 = scmp.ne.s32.totalorder %s55, %s69
      %p71 = scmp.eq.s32.totalorder %s24, 0
      %p72 = por %p70, %p71
      %s74 = sadd.s32 %s73, 1
      %p77 = scmp.eq.s32.totalorder %s18, 1
      %p78 = scmp.ne.s32.totalorder %s73, %s75
      %p79 = scmp.eq.s32.totalorder %s18, 0
      %p80 = por %p78, %p79
      %p81 = scmp.ne.s32.totalorder %s73, %s75
      %p82 = scmp.eq.s32.totalorder %s23, 1
      %p83 = por %p81, %p82
      %p84 = scmp.ne.s32.totalorder %s75, %s76
      %p85 = scmp.eq.s32.totalorder %s23, 0
      %p86 = por %p84, %p85
      %p87 = scmp.ne.s32.totalorder %s75, %s76
      %p88 = scmp.eq.s32.totalorder %s24, 1
      %p89 = por %p87, %p88
      %p91 = scmp.ne.s32.totalorder %s76, %s90
      %p92 = scmp.eq.s32.totalorder %s24, 0
      %p93 = por %p91, %p92
      %s95 = sadd.s32 %s94, 1
      %p98 = scmp.eq.s32.totalorder %s18, 1
      %p99 = scmp.ne.s32.totalorder %s94, %s96
      %p100 = scmp.eq.s32.totalorder %s18, 0
      %p101 = por %p99, %p100
      %p102 = scmp.ne.s32.totalorder %s94, %s96
      %p103 = scmp.eq.s32.totalorder %s23, 1
      %p104 = por %p102, %p103
      %p105 = scmp.ne.s32.totalorder %s96, %s97
      %p106 = scmp.eq.s32.totalorder %s23, 0
      %p107 = por %p105, %p106
      %p108 = scmp.ne.s32.totalorder %s96, %s97
      %p109 = scmp.eq.s32.totalorder %s24, 1
      %p110 = por %p108, %p109
      %p112 = scmp.ne.s32.totalorder %s97, %s111
      %p113 = scmp.eq.s32.totalorder %s24, 0
      %p114 = por %p112, %p113
      %s116 = sadd.s32 %s115, 1
      %p119 = scmp.eq.s32.totalorder %s18, 1
      %p120 = scmp.ne.s32.totalorder %s115, %s117
      %p121 = scmp.eq.s32.totalorder %s18, 0
      %p122 = por %p120, %p121
      %p123 = scmp.ne.s32.totalorder %s115, %s117
      %p124 = scmp.eq.s32.totalorder %s23, 1
      %p125 = por %p123, %p124
      %p126 = scmp.ne.s32.totalorder %s117, %s118
      %p127 = scmp.eq.s32.totalorder %s23, 0
      %p128 = por %p126, %p127
      %p129 = scmp.ne.s32.totalorder %s117, %s118
      %p130 = scmp.eq.s32.totalorder %s24, 1
      %p131 = por %p129, %p130
      %p133 = scmp.ne.s32.totalorder %s118, %s132
      %p134 = scmp.eq.s32.totalorder %s24, 0
      %p135 = por %p133, %p134
      %s137 = sadd.s32 %s136, 1
      %p140 = scmp.eq.s32.totalorder %s18, 1
      %p141 = scmp.ne.s32.totalorder %s136, %s138
      %p142 = scmp.eq.s32.totalorder %s18, 0
      %p143 = por %p141, %p142
      %p144 = scmp.ne.s32.totalorder %s136, %s138
      %p145 = scmp.eq.s32.totalorder %s23, 1
      %p146 = por %p144, %p145
      %p147 = scmp.ne.s32.totalorder %s138, %s139
      %p148 = scmp.eq.s32.totalorder %s23, 0
      %p149 = por %p147, %p148
      %p150 = scmp.ne.s32.totalorder %s138, %s139
      %p151 = scmp.eq.s32.totalorder %s24, 1
      %p152 = por %p150, %p151
      %p154 = scmp.ne.s32.totalorder %s139, %s153
      %p155 = scmp.eq.s32.totalorder %s24, 0
      %p156 = por %p154, %p155
      %s158 = sadd.s32 %s157, 1
      %p161 = scmp.eq.s32.totalorder %s18, 1
      %p162 = scmp.ne.s32.totalorder %s157, %s159
      %p163 = scmp.eq.s32.totalorder %s18, 0
      %p164 = por %p162, %p163
      %p165 = scmp.ne.s32.totalorder %s157, %s159
      %p166 = scmp.eq.s32.totalorder %s23, 1
      %p167 = por %p165, %p166
      %p168 = scmp.ne.s32.totalorder %s159, %s160
      %p169 = scmp.eq.s32.totalorder %s23, 0
      %p170 = por %p168, %p169
      %p171 = scmp.ne.s32.totalorder %s159, %s160
      %p172 = scmp.eq.s32.totalorder %s24, 1
      %p173 = por %p171, %p172
      %p175 = scmp.ne.s32.totalorder %s160, %s174
      %p176 = scmp.eq.s32.totalorder %s24, 0
      %p177 = por %p175, %p176
      %s178 = ssub.s32 %s18, %s25
      %p179 = scmp.eq.s32.totalorder %s178, 0
      %s181 = sadd.s32 %s180, 1
      %s182 = scalar_select %p179, %s180, %s181
      %p185 = pneg %p179
      %p186 = scmp.eq.s32.totalorder %s18, 1
      %p187 = por %p185, %p186
      %p188 = scmp.ne.s32.totalorder %s180, %s183
      %p189 = scmp.eq.s32.totalorder %s18, 0
      %p190 = por %p188, %p189
      %p191 = scmp.ne.s32.totalorder %s180, %s183
      %p192 = scmp.eq.s32.totalorder %s23, 1
      %p193 = por %p191, %p192
      %p194 = scmp.ne.s32.totalorder %s183, %s184
      %p195 = scmp.eq.s32.totalorder %s23, 0
      %p196 = por %p194, %p195
      %p197 = scmp.ne.s32.totalorder %s183, %s184
      %p198 = scmp.eq.s32.totalorder %s24, 1
      %p199 = por %p197, %p198
      %p201 = scmp.ne.s32.totalorder %s184, %s200
      %p202 = scmp.eq.s32.totalorder %s24, 0
      %p203 = por %p201, %p202
      %p204 = scmp.le.s32.totalorder 1, %s18
      %p205 = scmp.lt.s32.totalorder %s18, 3
      %p206 = pnand %p204, %p205
      %p207 = pneg %p206
      // Predicated region
      $region9: #{stability_net_batch_last.1} parent=5 // pred_check
        _
      $region10: #{stability_net_batch_last.1} parent=5 // pred_check_branch
        %209 = sbr.rel (%p206) target = $region12
      $region11: #{stability_net_batch_last.1} parent=5 // pred_region
        %s210 = ssub.s32 %s18, 1
        // Predicated region
        $region13: #{stability_net_batch_last.1} parent=11 // pred_check
          %p211 = pneg %p65
        $region14: #{stability_net_batch_last.1} parent=11 // pred_check_branch
          %213 = sbr.rel (%p211) target = $region16
        $region15: #{stability_net_batch_last.1} parent=11 // pred_region
          _
        $region16: #{stability_net_batch_last.1} parent=11 // pred_fallthru
          _
        // Predicated region
        $region17: #{stability_net_batch_last.1} parent=11 // pred_check
          %p214 = pneg %p86
        $region18: #{stability_net_batch_last.1} parent=11 // pred_check_branch
          %216 = sbr.rel (%p214) target = $region20
        $region19: #{stability_net_batch_last.1} parent=11 // pred_region
          _
        $region20: #{stability_net_batch_last.1} parent=11 // pred_fallthru
          _
        // Predicated region
        $region21: #{stability_net_batch_last.1} parent=11 // pred_check
          %p217 = pneg %p107
        $region22: #{stability_net_batch_last.1} parent=11 // pred_check_branch
          %219 = sbr.rel (%p217) target = $region24
        $region23: #{stability_net_batch_last.1} parent=11 // pred_region
          _
        $region24: #{stability_net_batch_last.1} parent=11 // pred_fallthru
          _
        // Predicated region
        $region25: #{stability_net_batch_last.1} parent=11 // pred_check
          %p220 = pneg %p128
        $region26: #{stability_net_batch_last.1} parent=11 // pred_check_branch
          %222 = sbr.rel (%p220) target = $region28
        $region27: #{stability_net_batch_last.1} parent=11 // pred_region
          _
        $region28: #{stability_net_batch_last.1} parent=11 // pred_fallthru
          _
        // Predicated region
        $region29: #{stability_net_batch_last.1} parent=11 // pred_check
          %p223 = pneg %p149
        $region30: #{stability_net_batch_last.1} parent=11 // pred_check_branch
          %225 = sbr.rel (%p223) target = $region32
        $region31: #{stability_net_batch_last.1} parent=11 // pred_region
          _
        $region32: #{stability_net_batch_last.1} parent=11 // pred_fallthru
          _
        // Predicated region
        $region33: #{stability_net_batch_last.1} parent=11 // pred_check
          %p226 = pneg %p170
        $region34: #{stability_net_batch_last.1} parent=11 // pred_check_branch
          %228 = sbr.rel (%p226) target = $region36
        $region35: #{stability_net_batch_last.1} parent=11 // pred_region
          _
        $region36: #{stability_net_batch_last.1} parent=11 // pred_fallthru
          _
      $region12: #{stability_net_batch_last.1} parent=5 // pred_fallthru
        _
      %p229 = scmp.lt.s32.totalorder %s18, 2
      // Predicated region
      $region37: #{stability_net_batch_last.1} parent=5 // pred_check
        %p230 = pneg %p229
      $region38: #{stability_net_batch_last.1} parent=5 // pred_check_branch
        %232 = sbr.rel (%p230) target = $region40
      $region39: #{stability_net_batch_last.1} parent=5 // pred_region
        // Predicated region
        $region41: #{stability_net_batch_last.1} parent=39 // pred_check
          %p233 = pneg %p38
        $region42: #{stability_net_batch_last.1} parent=39 // pred_check_branch
          %235 = sbr.rel (%p233) target = $region44
        $region43: #{stability_net_batch_last.1} parent=39 // pred_region
          %s236 = smul.u32 4, %s18
          %p237 = scmp.lt.s32.totalorder %s236, 7
          %s238 = scalar_select %p237, %s236, 7
          %s239 = smul.addr %s238, 4
          %s240 = scalar_lea.vmem %s0, %s239
          %s241 = smul.u32 4, %s18
        $region44: #{stability_net_batch_last.1} parent=39 // pred_fallthru
          _
      $region40: #{stability_net_batch_last.1} parent=5 // pred_fallthru
        _
      %p242 = scmp.le.s32.totalorder 1, %s18
      %p243 = scmp.lt.s32.totalorder %s18, 3
      %p244 = pnand %p242, %p243
      %p245 = pneg %p244
      // Predicated region
      $region45: #{stability_net_batch_last.1} parent=5 // pred_check
        _
      $region46: #{stability_net_batch_last.1} parent=5 // pred_check_branch
        %247 = sbr.rel (%p244) target = $region48
      $region47: #{stability_net_batch_last.1} parent=5 // pred_region
        %s248 = ssub.s32 %s18, 1
        %s249 = smul.u32 4, %s23
        %p250 = scmp.lt.s32.totalorder %s249, 7
        %s251 = scalar_select %p250, %s249, 7
        %s252 = smul.addr %s251, 4
        %s253 = scalar_lea.vmem %s0, %s252
        %p254 = pneg %p44
        %p255 = pneg %p41
        %p256 = pneg %p65
        %p257 = pneg %p62
        %p258 = pneg %p86
        %p259 = pneg %p83
        %p260 = pneg %p107
        %p261 = pneg %p104
        %p262 = pneg %p128
        %p263 = pneg %p125
        %p264 = pneg %p149
        %p265 = pneg %p146
        %p266 = pneg %p170
        %p267 = pneg %p167
        %p268 = pneg %p196
        %p269 = pneg %p193
        %s270 = sand.u32 %s183, 1
        %s271 = scalar_lea.sflag [#allocation4], %s270
        %s272 = sand.u32 %s183, 1
        %s273 = smul.addr %s272, 4
        %s274 = scalar_lea.vmem [#allocation3], %s273
        %s275 = smul.u32 4, %s23
        %p276 = scmp.lt.s32.totalorder %s275, 7
        %s277 = scalar_select %p276, %s275, 7
        %s278 = smul.addr %s277, 4
        %s279 = scalar_lea.vmem %s0, %s278
        %s280 = smul.u32 4, %s23
        %s281 = smul.u32 4, %s23
        %v282 = vld [vmem:[%s279] sm:$0x77]
        %v283 = vld [vmem:[%s279 + $0x8] sm:$0x77]
        %v284 = vld [vmem:[%s1] sm:$0xff]
        %v285 = vld [vmem:[%s1 + $0x8] sm:$0xff]
        %v286 = vld [vmem:[%s2] sm:$0xff]
        %v287 = vld [vmem:[%s2 + $0x8] sm:$0xff]
        %289 = vset.pattern.permute.xlu0 0
        %290 = vperm.xlu0 %289, %v286
        %v291 = vpop.permute.xlu0 %290
        %294 = vset.pattern.permute.xlu0 0
        %295 = vperm.xlu0 %294, %v287
        %v296 = vpop.permute.xlu0 %295
        %v300 = vcombine.high %v282, %v282
        %v301 = vcombine.high %v283, %v283
        %vm302 = vcmask 23552
        %v304 = vsel %vm302, %v284, 0
        %v307 = vsel %vm302, %v285, 0
        %vm309 = vcmask 1042432
        %v310 = vsel %vm309, %v282, 0
        %v312 = vsel %vm309, %v300, 0
        %v314 = vsel %vm309, %v283, 0
        %v316 = vsel %vm309, %v301, 0
        %318 = vmatprep.subr.mxu0 %v312
        %319 = vmatpush1.msra.mxu0 %v310
        %320 = vmatprep.subr.mxu0 0.0
        %321 = vmatpush1.msra.mxu0 0.0
        %322 = vmatprep.subr.mxu0 0.0
        %323 = vmatpush1.msra.mxu0 0.0
        %324 = vmatprep.subr.mxu0 0.0
        %325 = vmatpush1.msra.mxu0 0.0
        %326 = vmatprep.subr.mxu0 0.0
        %327 = vmatpush1.msra.mxu0 0.0
        %328 = vmatprep.subr.mxu0 0.0
        %329 = vmatpush1.msra.mxu0 0.0
        %330 = vmatprep.subr.mxu0 0.0
        %331 = vmatpush1.msra.mxu0 0.0
        %332 = vmatprep.subr.mxu0 0.0
        %333 = vmatpush1.msra.mxu0 0.0
        %334 = vmatprep.subr.mxu0 0.0
        %335 = vmatpush1.msra.mxu0 0.0
        %336 = vmatprep.subr.mxu0 0.0
        %337 = vmatpush1.msra.mxu0 0.0
        %338 = vmatprep.subr.mxu0 0.0
        %339 = vmatpush1.msra.mxu0 0.0
        %340 = vmatprep.subr.mxu0 0.0
        %341 = vmatpush1.msra.mxu0 0.0
        %342 = vmatprep.subr.mxu0 0.0
        %343 = vmatpush1.msra.mxu0 0.0
        %344 = vmatprep.subr.mxu0 0.0
        %345 = vmatpush1.msra.mxu0 0.0
        %346 = vmatprep.subr.mxu0 0.0
        %347 = vmatpush1.msra.mxu0 0.0
        %348 = vmatprep.subr.mxu0 0.0
        %349 = vmatpush1.msra.mxu0 0.0
        %350 = vmatprep.subr.mxu0 0.0
        %351 = vmatpush1.msra.mxu0 0.0
        %352 = vmatprep.subr.mxu0 0.0
        %353 = vmatpush1.msra.mxu0 0.0
        %354 = vmatprep.subr.mxu0 0.0
        %355 = vmatpush1.msra.mxu0 0.0
        %356 = vmatprep.subr.mxu0 0.0
        %357 = vmatpush1.msra.mxu0 0.0
        %358 = vmatprep.subr.mxu0 0.0
        %359 = vmatpush1.msra.mxu0 0.0
        %360 = vmatprep.subr.mxu0 0.0
        %361 = vmatpush1.msra.mxu0 0.0
        %362 = vmatprep.subr.mxu0 0.0
        %363 = vmatpush1.msra.mxu0 0.0
        %364 = vmatprep.subr.mxu0 0.0
        %365 = vmatpush1.msra.mxu0 0.0
        %366 = vmatprep.subr.mxu0 0.0
        %367 = vmatpush1.msra.mxu0 0.0
        %368 = vmatprep.subr.mxu0 0.0
        %369 = vmatpush1.msra.mxu0 0.0
        %370 = vmatprep.subr.mxu0 0.0
        %371 = vmatpush1.msra.mxu0 0.0
        %372 = vmatprep.subr.mxu0 0.0
        %373 = vmatpush1.msra.mxu0 0.0
        %374 = vmatprep.subr.mxu0 0.0
        %375 = vmatpush1.msra.mxu0 0.0
        %376 = vmatprep.subr.mxu0 0.0
        %377 = vmatpush1.msra.mxu0 0.0
        %378 = vmatprep.subr.mxu0 0.0
        %379 = vmatpush1.msra.mxu0 0.0
        %380 = vmatprep.subr.mxu0 0.0
        %381 = vmatpush1.msra.mxu0 0.0
        %382 = vmatprep.mubr.f32.mxu0 0.0
        %383 = vmatmul.mubr.f32.gmra.mrb[0].mxu0 %v304
        %v384 = vpop.f32.mrb[0].mxu0
        %v385 = vadd.f32 %v291, %v384
        %v386 = vpop.f32.mrb[0].mxu0
        %v387 = vadd.f32 %v291, %v386
        %388 = vmatprep.mubr.f32.mxu0 0.0
        %389 = vmatmul.mubr.f32.gmra.mrb[0].mxu0 %v307
        %v390 = vpop.f32.mrb[0].mxu0
        %v391 = vadd.f32 %v296, %v390
        %v392 = vpop.f32.mrb[0].mxu0
        %v393 = vadd.f32 %v296, %v392
        %394 = vdwg.mxu0
        %395 = vmatprep.subr.mxu0 %v316
        %396 = vmatpush1.msra.mxu0 %v314
        %397 = vmatprep.subr.mxu0 0.0
        %398 = vmatpush1.msra.mxu0 0.0
        %399 = vmatprep.subr.mxu0 0.0
        %400 = vmatpush1.msra.mxu0 0.0
        %401 = vmatprep.subr.mxu0 0.0
        %402 = vmatpush1.msra.mxu0 0.0
        %403 = vmatprep.subr.mxu0 0.0
        %404 = vmatpush1.msra.mxu0 0.0
        %405 = vmatprep.subr.mxu0 0.0
        %406 = vmatpush1.msra.mxu0 0.0
        %407 = vmatprep.subr.mxu0 0.0
        %408 = vmatpush1.msra.mxu0 0.0
        %409 = vmatprep.subr.mxu0 0.0
        %410 = vmatpush1.msra.mxu0 0.0
        %411 = vmatprep.subr.mxu0 0.0
        %412 = vmatpush1.msra.mxu0 0.0
        %413 = vmatprep.subr.mxu0 0.0
        %414 = vmatpush1.msra.mxu0 0.0
        %415 = vmatprep.subr.mxu0 0.0
        %416 = vmatpush1.msra.mxu0 0.0
        %417 = vmatprep.subr.mxu0 0.0
        %418 = vmatpush1.msra.mxu0 0.0
        %419 = vmatprep.subr.mxu0 0.0
        %420 = vmatpush1.msra.mxu0 0.0
        %421 = vmatprep.subr.mxu0 0.0
        %422 = vmatpush1.msra.mxu0 0.0
        %423 = vmatprep.subr.mxu0 0.0
        %424 = vmatpush1.msra.mxu0 0.0
        %425 = vmatprep.subr.mxu0 0.0
        %426 = vmatpush1.msra.mxu0 0.0
        %427 = vmatprep.subr.mxu0 0.0
        %428 = vmatpush1.msra.mxu0 0.0
        %429 = vmatprep.subr.mxu0 0.0
        %430 = vmatpush1.msra.mxu0 0.0
        %431 = vmatprep.subr.mxu0 0.0
        %432 = vmatpush1.msra.mxu0 0.0
        %433 = vmatprep.subr.mxu0 0.0
        %434 = vmatpush1.msra.mxu0 0.0
        %435 = vmatprep.subr.mxu0 0.0
        %436 = vmatpush1.msra.mxu0 0.0
        %437 = vmatprep.subr.mxu0 0.0
        %438 = vmatpush1.msra.mxu0 0.0
        %439 = vmatprep.subr.mxu0 0.0
        %440 = vmatpush1.msra.mxu0 0.0
        %441 = vmatprep.subr.mxu0 0.0
        %442 = vmatpush1.msra.mxu0 0.0
        %443 = vmatprep.subr.mxu0 0.0
        %444 = vmatpush1.msra.mxu0 0.0
        %445 = vmatprep.subr.mxu0 0.0
        %446 = vmatpush1.msra.mxu0 0.0
        %447 = vmatprep.subr.mxu0 0.0
        %448 = vmatpush1.msra.mxu0 0.0
        %449 = vmatprep.subr.mxu0 0.0
        %450 = vmatpush1.msra.mxu0 0.0
        %451 = vmatprep.subr.mxu0 0.0
        %452 = vmatpush1.msra.mxu0 0.0
        %453 = vmatprep.subr.mxu0 0.0
        %454 = vmatpush1.msra.mxu0 0.0
        %455 = vmatprep.subr.mxu0 0.0
        %456 = vmatpush1.msra.mxu0 0.0
        %457 = vmatprep.subr.mxu0 0.0
        %458 = vmatpush1.msra.mxu0 0.0
        %459 = vmatprep.mubr.f32.mxu0 0.0
        %460 = vmatmul.mubr.f32.gmra.mrb[0].mxu0 %v304
        %v461 = vpop.f32.mrb[0].mxu0
        %v462 = vadd.f32 %v291, %v461
        %v463 = vpop.f32.mrb[0].mxu0
        %v464 = vadd.f32 %v291, %v463
        %465 = vmatprep.mubr.f32.mxu0 0.0
        %466 = vmatmul.mubr.f32.gmra.mrb[0].mxu0 %v307
        %v467 = vpop.f32.mrb[0].mxu0
        %v468 = vadd.f32 %v296, %v467
        %v469 = vpop.f32.mrb[0].mxu0
        %v470 = vadd.f32 %v296, %v469
        %471 = vdwg.mxu0
        %v472 = vmax.f32 %v385, 0.0
        %v473 = vmax.f32 %v387, 0.0
        %v474 = vmax.f32 %v462, 0.0
        %v475 = vmax.f32 %v464, 0.0
        %v476 = vmax.f32 %v391, 0.0
        %v477 = vmax.f32 %v393, 0.0
        %v478 = vmax.f32 %v468, 0.0
        %v479 = vmax.f32 %v470, 0.0
        %v480 = vld [vmem:[%s3] sm:$0xff]
        %v481 = vld [vmem:[%s4] sm:$0xff]
        %483 = vset.pattern.permute.xlu0 0
        %484 = vperm.xlu0 %483, %v481
        %v485 = vpop.permute.xlu0 %484
        %vm487 = vcmask 130048
        %v489 = vsel %vm487, %v480, 0
        %491 = vmatprep.subr.mxu0 %v473
        %492 = vmatpush1.msra.mxu0 %v472
        %493 = vmatprep.subr.mxu0 %v477
        %494 = vmatpush1.msra.mxu0 %v476
        %495 = vmatprep.subr.mxu0 0.0
        %496 = vmatpush1.msra.mxu0 0.0
        %497 = vmatprep.subr.mxu0 0.0
        %498 = vmatpush1.msra.mxu0 0.0
        %499 = vmatprep.subr.mxu0 0.0
        %500 = vmatpush1.msra.mxu0 0.0
        %501 = vmatprep.subr.mxu0 0.0
        %502 = vmatpush1.msra.mxu0 0.0
        %503 = vmatprep.subr.mxu0 0.0
        %504 = vmatpush1.msra.mxu0 0.0
        %505 = vmatprep.subr.mxu0 0.0
        %506 = vmatpush1.msra.mxu0 0.0
        %507 = vmatprep.subr.mxu0 0.0
        %508 = vmatpush1.msra.mxu0 0.0
        %509 = vmatprep.subr.mxu0 0.0
        %510 = vmatpush1.msra.mxu0 0.0
        %511 = vmatprep.subr.mxu0 0.0
        %512 = vmatpush1.msra.mxu0 0.0
        %513 = vmatprep.subr.mxu0 0.0
        %514 = vmatpush1.msra.mxu0 0.0
        %515 = vmatprep.subr.mxu0 0.0
        %516 = vmatpush1.msra.mxu0 0.0
        %517 = vmatprep.subr.mxu0 0.0
        %518 = vmatpush1.msra.mxu0 0.0
        %519 = vmatprep.subr.mxu0 0.0
        %520 = vmatpush1.msra.mxu0 0.0
        %521 = vmatprep.subr.mxu0 0.0
        %522 = vmatpush1.msra.mxu0 0.0
        %523 = vmatprep.subr.mxu0 0.0
        %524 = vmatpush1.msra.mxu0 0.0
        %525 = vmatprep.subr.mxu0 0.0
        %526 = vmatpush1.msra.mxu0 0.0
        %527 = vmatprep.subr.mxu0 0.0
        %528 = vmatpush1.msra.mxu0 0.0
        %529 = vmatprep.subr.mxu0 0.0
        %530 = vmatpush1.msra.mxu0 0.0
        %531 = vmatprep.subr.mxu0 0.0
        %532 = vmatpush1.msra.mxu0 0.0
        %533 = vmatprep.subr.mxu0 0.0
        %534 = vmatpush1.msra.mxu0 0.0
        %535 = vmatprep.subr.mxu0 0.0
        %536 = vmatpush1.msra.mxu0 0.0
        %537 = vmatprep.subr.mxu0 0.0
        %538 = vmatpush1.msra.mxu0 0.0
        %539 = vmatprep.subr.mxu0 0.0
        %540 = vmatpush1.msra.mxu0 0.0
        %541 = vmatprep.subr.mxu0 0.0
        %542 = vmatpush1.msra.mxu0 0.0
        %543 = vmatprep.subr.mxu0 0.0
        %544 = vmatpush1.msra.mxu0 0.0
        %545 = vmatprep.subr.mxu0 0.0
        %546 = vmatpush1.msra.mxu0 0.0
        %547 = vmatprep.subr.mxu0 0.0
        %548 = vmatpush1.msra.mxu0 0.0
        %549 = vmatprep.subr.mxu0 0.0
        %550 = vmatpush1.msra.mxu0 0.0
        %551 = vmatprep.subr.mxu0 0.0
        %552 = vmatpush1.msra.mxu0 0.0
        %553 = vmatprep.subr.mxu0 0.0
        %554 = vmatpush1.msra.mxu0 0.0
        %555 = vmatprep.mubr.f32.mxu0 0.0
        %556 = vmatmul.mubr.f32.gmra.mrb[0].mxu0 %v489
        %v557 = vpop.f32.mrb[0].mxu0
        %v558 = vadd.f32 %v485, %v557
        %v559 = vpop.f32.mrb[0].mxu0
        %v560 = vadd.f32 %v485, %v559
        %561 = vdwg.mxu0
        %562 = vmatprep.subr.mxu0 %v475
        %563 = vmatpush1.msra.mxu0 %v474
        %564 = vmatprep.subr.mxu0 %v479
        %565 = vmatpush1.msra.mxu0 %v478
        %566 = vmatprep.subr.mxu0 0.0
        %567 = vmatpush1.msra.mxu0 0.0
        %568 = vmatprep.subr.mxu0 0.0
        %569 = vmatpush1.msra.mxu0 0.0
        %570 = vmatprep.subr.mxu0 0.0
        %571 = vmatpush1.msra.mxu0 0.0
        %572 = vmatprep.subr.mxu0 0.0
        %573 = vmatpush1.msra.mxu0 0.0
        %574 = vmatprep.subr.mxu0 0.0
        %575 = vmatpush1.msra.mxu0 0.0
        %576 = vmatprep.subr.mxu0 0.0
        %577 = vmatpush1.msra.mxu0 0.0
        %578 = vmatprep.subr.mxu0 0.0
        %579 = vmatpush1.msra.mxu0 0.0
        %580 = vmatprep.subr.mxu0 0.0
        %581 = vmatpush1.msra.mxu0 0.0
        %582 = vmatprep.subr.mxu0 0.0
        %583 = vmatpush1.msra.mxu0 0.0
        %584 = vmatprep.subr.mxu0 0.0
        %585 = vmatpush1.msra.mxu0 0.0
        %586 = vmatprep.subr.mxu0 0.0
        %587 = vmatpush1.msra.mxu0 0.0
        %588 = vmatprep.subr.mxu0 0.0
        %589 = vmatpush1.msra.mxu0 0.0
        %590 = vmatprep.subr.mxu0 0.0
        %591 = vmatpush1.msra.mxu0 0.0
        %592 = vmatprep.subr.mxu0 0.0
        %593 = vmatpush1.msra.mxu0 0.0
        %594 = vmatprep.subr.mxu0 0.0
        %595 = vmatpush1.msra.mxu0 0.0
        %596 = vmatprep.subr.mxu0 0.0
        %597 = vmatpush1.msra.mxu0 0.0
        %598 = vmatprep.subr.mxu0 0.0
        %599 = vmatpush1.msra.mxu0 0.0
        %600 = vmatprep.subr.mxu0 0.0
        %601 = vmatpush1.msra.mxu0 0.0
        %602 = vmatprep.subr.mxu0 0.0
        %603 = vmatpush1.msra.mxu0 0.0
        %604 = vmatprep.subr.mxu0 0.0
        %605 = vmatpush1.msra.mxu0 0.0
        %606 = vmatprep.subr.mxu0 0.0
        %607 = vmatpush1.msra.mxu0 0.0
        %608 = vmatprep.subr.mxu0 0.0
        %609 = vmatpush1.msra.mxu0 0.0
        %610 = vmatprep.subr.mxu0 0.0
        %611 = vmatpush1.msra.mxu0 0.0
        %612 = vmatprep.subr.mxu0 0.0
        %613 = vmatpush1.msra.mxu0 0.0
        %614 = vmatprep.subr.mxu0 0.0
        %615 = vmatpush1.msra.mxu0 0.0
        %616 = vmatprep.subr.mxu0 0.0
        %617 = vmatpush1.msra.mxu0 0.0
        %618 = vmatprep.subr.mxu0 0.0
        %619 = vmatpush1.msra.mxu0 0.0
        %620 = vmatprep.subr.mxu0 0.0
        %621 = vmatpush1.msra.mxu0 0.0
        %622 = vmatprep.subr.mxu0 0.0
        %623 = vmatpush1.msra.mxu0 0.0
        %624 = vmatprep.subr.mxu0 0.0
        %625 = vmatpush1.msra.mxu0 0.0
        %626 = vmatprep.mubr.f32.mxu0 0.0
        %627 = vmatmul.mubr.f32.gmra.mrb[0].mxu0 %v489
        %v628 = vpop.f32.mrb[0].mxu0
        %v629 = vadd.f32 %v485, %v628
        %v630 = vpop.f32.mrb[0].mxu0
        %v631 = vadd.f32 %v485, %v630
        %632 = vdwg.mxu0
        %v633 = vmax.f32 %v558, 0.0
        %v634 = vmax.f32 %v560, 0.0
        %v635 = vmax.f32 %v629, 0.0
        %v636 = vmax.f32 %v631, 0.0
        %v637 = vld [vmem:[%s5] sm:$0x1]
        %v638 = vld [vmem:[#allocation2] sm:$0x1]
        %640 = vset.pattern.permute.xlu0 0
        %641 = vperm.xlu0 %640, %v638
        %v642 = vpop.permute.xlu0 %641
        %v644 = vlaneseq
        %v645 = vshrl.u32 %v644, 7
        %v646 = vsub.s32 0, %v645
        %v647 = vrot.slane %v642, %v646
        %vm648 = vcmask 64512
        %v650 = vsel %vm648, %v637, 0
        %652 = vmatprep.subr.mxu0 %v634
        %653 = vmatpush1.msra.mxu0 %v633
        %654 = vmatprep.subr.mxu0 0.0
        %655 = vmatpush1.msra.mxu0 0.0
        %656 = vmatprep.subr.mxu0 0.0
        %657 = vmatpush1.msra.mxu0 0.0
        %658 = vmatprep.subr.mxu0 0.0
        %659 = vmatpush1.msra.mxu0 0.0
        %660 = vmatprep.subr.mxu0 0.0
        %661 = vmatpush1.msra.mxu0 0.0
        %662 = vmatprep.subr.mxu0 0.0
        %663 = vmatpush1.msra.mxu0 0.0
        %664 = vmatprep.subr.mxu0 0.0
        %665 = vmatpush1.msra.mxu0 0.0
        %666 = vmatprep.subr.mxu0 0.0
        %667 = vmatpush1.msra.mxu0 0.0
        %668 = vmatprep.subr.mxu0 0.0
        %669 = vmatpush1.msra.mxu0 0.0
        %670 = vmatprep.subr.mxu0 0.0
        %671 = vmatpush1.msra.mxu0 0.0
        %672 = vmatprep.subr.mxu0 0.0
        %673 = vmatpush1.msra.mxu0 0.0
        %674 = vmatprep.subr.mxu0 0.0
        %675 = vmatpush1.msra.mxu0 0.0
        %676 = vmatprep.subr.mxu0 0.0
        %677 = vmatpush1.msra.mxu0 0.0
        %678 = vmatprep.subr.mxu0 0.0
        %679 = vmatpush1.msra.mxu0 0.0
        %680 = vmatprep.subr.mxu0 0.0
        %681 = vmatpush1.msra.mxu0 0.0
        %682 = vmatprep.subr.mxu0 0.0
        %683 = vmatpush1.msra.mxu0 0.0
        %684 = vmatprep.subr.mxu0 0.0
        %685 = vmatpush1.msra.mxu0 0.0
        %686 = vmatprep.subr.mxu0 0.0
        %687 = vmatpush1.msra.mxu0 0.0
        %688 = vmatprep.subr.mxu0 0.0
        %689 = vmatpush1.msra.mxu0 0.0
        %690 = vmatprep.subr.mxu0 0.0
        %691 = vmatpush1.msra.mxu0 0.0
        %692 = vmatprep.subr.mxu0 0.0
        %693 = vmatpush1.msra.mxu0 0.0
        %694 = vmatprep.subr.mxu0 0.0
        %695 = vmatpush1.msra.mxu0 0.0
        %696 = vmatprep.subr.mxu0 0.0
        %697 = vmatpush1.msra.mxu0 0.0
        %698 = vmatprep.subr.mxu0 0.0
        %699 = vmatpush1.msra.mxu0 0.0
        %700 = vmatprep.subr.mxu0 0.0
        %701 = vmatpush1.msra.mxu0 0.0
        %702 = vmatprep.subr.mxu0 0.0
        %703 = vmatpush1.msra.mxu0 0.0
        %704 = vmatprep.subr.mxu0 0.0
        %705 = vmatpush1.msra.mxu0 0.0
        %706 = vmatprep.subr.mxu0 0.0
        %707 = vmatpush1.msra.mxu0 0.0
        %708 = vmatprep.subr.mxu0 0.0
        %709 = vmatpush1.msra.mxu0 0.0
        %710 = vmatprep.subr.mxu0 0.0
        %711 = vmatpush1.msra.mxu0 0.0
        %712 = vmatprep.subr.mxu0 0.0
        %713 = vmatpush1.msra.mxu0 0.0
        %714 = vmatprep.subr.mxu0 0.0
        %715 = vmatpush1.msra.mxu0 0.0
        %716 = vmatprep.mubr.f32.mxu0 0.0
        %717 = vmatmul.mubr.f32.gmra.mrb[0].mxu0 %v650
        %v718 = vpop.f32.mrb[0].mxu0
        %v719 = vadd.f32 %v647, %v718
        %v720 = vpop.f32.mrb[0].mxu0
        %v721 = vadd.f32 %v647, %v720
        %722 = vdwg.mxu0
        %723 = vmatprep.subr.mxu0 %v636
        %724 = vmatpush1.msra.mxu0 %v635
        %725 = vmatprep.subr.mxu0 0.0
        %726 = vmatpush1.msra.mxu0 0.0
        %727 = vmatprep.subr.mxu0 0.0
        %728 = vmatpush1.msra.mxu0 0.0
        %729 = vmatprep.subr.mxu0 0.0
        %730 = vmatpush1.msra.mxu0 0.0
        %731 = vmatprep.subr.mxu0 0.0
        %732 = vmatpush1.msra.mxu0 0.0
        %733 = vmatprep.subr.mxu0 0.0
        %734 = vmatpush1.msra.mxu0 0.0
        %735 = vmatprep.subr.mxu0 0.0
        %736 = vmatpush1.msra.mxu0 0.0
        %737 = vmatprep.subr.mxu0 0.0
        %738 = vmatpush1.msra.mxu0 0.0
        %739 = vmatprep.subr.mxu0 0.0
        %740 = vmatpush1.msra.mxu0 0.0
        %741 = vmatprep.subr.mxu0 0.0
        %742 = vmatpush1.msra.mxu0 0.0
        %743 = vmatprep.subr.mxu0 0.0
        %744 = vmatpush1.msra.mxu0 0.0
        %745 = vmatprep.subr.mxu0 0.0
        %746 = vmatpush1.msra.mxu0 0.0
        %747 = vmatprep.subr.mxu0 0.0
        %748 = vmatpush1.msra.mxu0 0.0
        %749 = vmatprep.subr.mxu0 0.0
        %750 = vmatpush1.msra.mxu0 0.0
        %751 = vmatprep.subr.mxu0 0.0
        %752 = vmatpush1.msra.mxu0 0.0
        %753 = vmatprep.subr.mxu0 0.0
        %754 = vmatpush1.msra.mxu0 0.0
        %755 = vmatprep.subr.mxu0 0.0
        %756 = vmatpush1.msra.mxu0 0.0
        %757 = vmatprep.subr.mxu0 0.0
        %758 = vmatpush1.msra.mxu0 0.0
        %759 = vmatprep.subr.mxu0 0.0
        %760 = vmatpush1.msra.mxu0 0.0
        %761 = vmatprep.subr.mxu0 0.0
        %762 = vmatpush1.msra.mxu0 0.0
        %763 = vmatprep.subr.mxu0 0.0
        %764 = vmatpush1.msra.mxu0 0.0
        %765 = vmatprep.subr.mxu0 0.0
        %766 = vmatpush1.msra.mxu0 0.0
        %767 = vmatprep.subr.mxu0 0.0
        %768 = vmatpush1.msra.mxu0 0.0
        %769 = vmatprep.subr.mxu0 0.0
        %770 = vmatpush1.msra.mxu0 0.0
        %771 = vmatprep.subr.mxu0 0.0
        %772 = vmatpush1.msra.mxu0 0.0
        %773 = vmatprep.subr.mxu0 0.0
        %774 = vmatpush1.msra.mxu0 0.0
        %775 = vmatprep.subr.mxu0 0.0
        %776 = vmatpush1.msra.mxu0 0.0
        %777 = vmatprep.subr.mxu0 0.0
        %778 = vmatpush1.msra.mxu0 0.0
        %779 = vmatprep.subr.mxu0 0.0
        %780 = vmatpush1.msra.mxu0 0.0
        %781 = vmatprep.subr.mxu0 0.0
        %782 = vmatpush1.msra.mxu0 0.0
        %783 = vmatprep.subr.mxu0 0.0
        %784 = vmatpush1.msra.mxu0 0.0
        %785 = vmatprep.subr.mxu0 0.0
        %786 = vmatpush1.msra.mxu0 0.0
        %787 = vmatprep.mubr.f32.mxu0 0.0
        %788 = vmatmul.mubr.f32.gmra.mrb[0].mxu0 %v650
        %v789 = vpop.f32.mrb[0].mxu0
        %v790 = vadd.f32 %v647, %v789
        %v791 = vpop.f32.mrb[0].mxu0
        %v792 = vadd.f32 %v647, %v791
        %793 = vdwg.mxu0
        %v794 = vxor.u32 %v719, 2147483648
        %v795 = vxor.u32 %v721, 2147483648
        %v796 = vxor.u32 %v790, 2147483648
        %v797 = vxor.u32 %v792, 2147483648
        %v798 = vmul.f32 %v794, 1.442695
        %v799 = vpow.pop %v798
        %v800 = vmul.f32 %v795, 1.442695
        %v801 = vpow.pop %v800
        %v802 = vmul.f32 %v796, 1.442695
        %v803 = vpow.pop %v802
        %v804 = vmul.f32 %v797, 1.442695
        %v805 = vpow.pop %v804
        %v806 = vadd.f32 %v799, 1.0
        %v807 = vadd.f32 %v801, 1.0
        %v808 = vadd.f32 %v803, 1.0
        %v809 = vadd.f32 %v805, 1.0
        %v810 = vrcp.pop %v806
        %v811 = vmul.f32 1.0, %v810
        %v812 = vrcp.pop %v807
        %v813 = vmul.f32 1.0, %v812
        %v814 = vrcp.pop %v808
        %v815 = vmul.f32 1.0, %v814
        %v816 = vrcp.pop %v809
        %v817 = vmul.f32 1.0, %v816
        %v822 = vcombine.low %v811, %v813
        %v823 = vcombine.low %v815, %v817
        %v825 = vunpack.c.l.s4 1966171168
        %v826 = vunpack.c.0.s8 %v825
        %v827 = vlaneseq
        %v828 = vshrl.u32 %v827, 7
        %v829 = vsub.s32 %v826, %v828
        %v830 = vrot.slane %v822, %v829
        %v832 = vunpack.c.l.s4 1966171168
        %v833 = vunpack.c.0.s8 %v832
        %v834 = vlaneseq
        %v835 = vshrl.u32 %v834, 7
        %v836 = vsub.s32 %v833, %v835
        %v837 = vrot.slane %v823, %v836
        %v838 = vcombine.low %v830, %v837
        %v840 = vunpack.c.l.s4 1966171168
        %v841 = vunpack.c.0.s8 %v840
        %v842 = vlaneseq
        %v843 = vshrl.u32 %v842, 7
        %v844 = vsub.s32 %v841, %v843
        %v845 = vrot.slane %v838, %v844
        %v847 = vlaneseq
        %vm848 = vcmp.ge.s32.totalorder %v847, 0
        %vm849 = vcmp.lt.s32.totalorder %v847, 512
        %vm850 = vmand %vm848, %vm849
        %851 = vst.msk [vmem:[%s274] sm:$0xf] %vm850, %v845
        %s852 = sand.u32 %s183, 1
        %s853 = scalar_lea.sflag [#allocation4], %s852
        %s854 = sand.u32 %s183, 1
        %s855 = smul.addr %s854, 4
        %s856 = scalar_lea.vmem [#allocation3], %s855
        // Predicated region
        $region49: #{stability_net_batch_last.1} parent=47 // pred_check
          %p857 = pneg %p193
        $region50: #{stability_net_batch_last.1} parent=47 // pred_check_branch
          %859 = sbr.rel (%p857) target = $region52
        $region51: #{stability_net_batch_last.1} parent=47 // pred_region
          %s860 = smul.u32 4, %s23
          %s862 = ssub.s32 64, 64
          %863 = vsyncadd %s853, %s862
          %s864 = smul.addr %s860, 16
          %s865 = scalar_lea.hbm %s7, %s864
          %s867 = sshll.u32 %s856, 4
          %s868 = int_to_ptr.vmem [resolvable:$true] %s867
          %870 = dma.vmem_to_hbm [thread:$0]  %s868, 64, %s865, %s853
        $region52: #{stability_net_batch_last.1} parent=47 // pred_fallthru
          _
      $region48: #{stability_net_batch_last.1} parent=5 // pred_fallthru
        _
      %p871 = scmp.le.s32.totalorder 2, %s18
      // Predicated region
      $region53: #{stability_net_batch_last.1} parent=5 // pred_check
        %p872 = pneg %p871
      $region54: #{stability_net_batch_last.1} parent=5 // pred_check_branch
        %874 = sbr.rel (%p872) target = $region56
      $region55: #{stability_net_batch_last.1} parent=5 // pred_region
        %s875 = ssub.s32 %s18, 2
        // Predicated region
        $region57: #{stability_net_batch_last.1} parent=55 // pred_check
          %p876 = pneg %p199
        $region58: #{stability_net_batch_last.1} parent=55 // pred_check_branch
          %878 = sbr.rel (%p876) target = $region60
        $region59: #{stability_net_batch_last.1} parent=55 // pred_region
          %s879 = sand.u32 %s184, 1
          %s880 = scalar_lea.sflag [#allocation4], %s879
          %s881 = sand.u32 %s184, 1
          %s882 = smul.addr %s881, 4
          %s883 = scalar_lea.vmem [#allocation3], %s882
          %884 = dma.done %s880, 64
        $region60: #{stability_net_batch_last.1} parent=55 // pred_fallthru
          _
      $region56: #{stability_net_batch_last.1} parent=5 // pred_fallthru
        _
    $region6: #{stability_net_batch_last.1} parent=1 // loop_footer
      %s22 = sadd.s32 1, %s18
    $region7: #{stability_net_batch_last.1} parent=1 // loop_footer_branch
      %17 = sbr.rel target = $region3
    $region8: #{stability_net_batch_last.1} parent=1 // loop_exit
      _
    %885 = vsyncpa [#allocation4], 1
    %s886 = scalar_lea.sflag [#allocation4], 1
    %887 = vsyncpa %s886, 1

</llo_original>
